<compile_context>
chip_gen: v6e
topology: v6e:2x2x1
jax: 0.10.0
libtpu: 0.0.40
codegen_flags: <defaults>
</compile_context>

<pallas_src>
import functools

import jax
import jax.numpy as jnp
from jax.experimental import pallas as pl
from jax.experimental.pallas import tpu as pltpu


def _zero_shot_kernel(x_ref, w_ref, b_ref, out_ref):
    # x_ref: [TB, H], w_ref: [H, 1], b_ref: [1, 1], out_ref: [TB, 1]
    acc = jnp.dot(x_ref[...], w_ref[...], preferred_element_type=jnp.float32)
    out_ref[...] = (acc + b_ref[...]).astype(out_ref.dtype)


def _pick_tb(b_pad, h, itemsize):
    """Largest multiple-of-8 batch tile whose double-buffered x block fits a
    conservative per-input VMEM budget (safe on v5e/v6e/v7x)."""
    budget_bytes = 12 * 1024 * 1024  # per-input double-buffer budget
    tb = budget_bytes // (2 * max(h, 1) * itemsize)
    tb = max(8, (tb // 8) * 8)
    tb = min(tb, 2048)       # ~512-2048 rows is the pipelining sweet spot
    tb = min(tb, b_pad)
    return int(tb)


def single_class_zero_shot(x, w, b, *, true_id):
    """Fused (inner linear model + True-column select) Pallas kernel.

    Args:
      x: [B, H] float32 or bfloat16 input features.
      w: [H, C] classifier weight.
      b: [C]    classifier bias.
      true_id: static int index of the "entailment"/True class, or None.

    Returns:
      dict(logits=[B, 1] float32), matching the PyTorch module's output.
    """
    B, H = x.shape
    Hw, C = w.shape
    assert H == Hw, (H, Hw)
    assert not (C > 1 and true_id is None), (
        "true_id must be defined if the model was originally multiclass")

    col = 0 if true_id is None else int(true_id)
    assert 0 <= col < C, f"true_id {col} out of range for C={C}"

    # Hoist the column select out of the kernel: only ship the True column.
    w_col = w[:, col:col + 1].astype(x.dtype)                 # [H, 1]
    b_col = b.reshape(C)[col].astype(jnp.float32).reshape(1, 1)  # [1, 1]

    itemsize = jnp.dtype(x.dtype).itemsize

    # Pad batch to a multiple of 8 (sublane) and then to a multiple of TB so
    # every grid step sees a full, aligned block.
    b_pad8 = ((B + 7) // 8) * 8
    tb = _pick_tb(b_pad8, H, itemsize)
    n_blocks = pl.cdiv(b_pad8, tb)
    b_pad = n_blocks * tb
    if b_pad != B:
        x_in = jnp.pad(x, ((0, b_pad - B), (0, 0)))
    else:
        x_in = x

    # Scoped VMEM request: double-buffered x tile + resident W/bias/out + headroom.
    needed = 2 * tb * H * itemsize + 2 * (H * itemsize) + 2 * (tb * 4) + (1 << 20)
    vmem_limit = int(min(48 * 1024 * 1024, max(16 * 1024 * 1024, 2 * needed)))

    cost = pl.CostEstimate(
        flops=2 * b_pad * H,                     # x @ w_col
        transcendentals=0,
        bytes_accessed=b_pad * H * itemsize + H * itemsize + b_pad * 4 + 4,
    )

    out = pl.pallas_call(
        _zero_shot_kernel,
        out_shape=jax.ShapeDtypeStruct((b_pad, 1), jnp.float32),
        grid=(n_blocks,),
        in_specs=[
            pl.BlockSpec((tb, H), lambda i: (i, 0)),   # x: tiled over batch
            pl.BlockSpec((H, 1), lambda i: (0, 0)),    # W column: resident
            pl.BlockSpec((1, 1), lambda i: (0, 0)),    # bias scalar: resident
        ],
        out_specs=pl.BlockSpec((tb, 1), lambda i: (i, 0)),
        compiler_params=pltpu.CompilerParams(
            dimension_semantics=("parallel",),         # megacore on v7x
            vmem_limit_bytes=vmem_limit,
        ),
        cost_estimate=cost,
    )(x_in, w_col, b_col)

    if b_pad != B:
        out = out[:B]
    return dict(logits=out)


def _reference(x, w, b, *, true_id):
    logits = x.astype(jnp.float32) @ w.astype(jnp.float32) + b.astype(jnp.float32)
    if true_id is not None:
        return logits[:, true_id:true_id + 1]
    return logits[:, 0:1]


if __name__ == "__main__":
    key = jax.random.PRNGKey(0)
    kx, kw, kb, kx2 = jax.random.split(key, 4)

    # Small NLI-like shapes: batch=8 pairs, hidden=32, 3 classes
    # (contradiction, neutral, entailment); true_id = 2.
    B, H, C = 8, 32, 3
    true_id = 2

    x = jax.random.normal(kx, (B, H), dtype=jnp.float32)
    w = jax.random.normal(kw, (H, C), dtype=jnp.float32) * 0.1
    b = jax.random.normal(kb, (C,), dtype=jnp.float32) * 0.01

    out = single_class_zero_shot(x, w, b, true_id=true_id)
    logits = jax.block_until_ready(out["logits"])
    ref = _reference(x, w, b, true_id=true_id)
    assert logits.shape == (B, 1), logits.shape
    assert jnp.allclose(logits, ref, atol=1e-5, rtol=1e-5), "mismatch vs reference"

    # Exercise the non-multiple-of-8 batch padding path.
    B2 = 5
    x2 = jax.random.normal(kx2, (B2, H), dtype=jnp.float32)
    out2 = single_class_zero_shot(x2, w, b, true_id=true_id)
    logits2 = jax.block_until_ready(out2["logits"])
    ref2 = _reference(x2, w, b, true_id=true_id)
    assert logits2.shape == (B2, 1), logits2.shape
    assert jnp.allclose(logits2, ref2, atol=1e-5, rtol=1e-5), "mismatch (padded batch)"

    # bf16-input path (halves dominant x HBM traffic; f32 MXU accumulation).
    out_bf16 = single_class_zero_shot(
        x.astype(jnp.bfloat16), w.astype(jnp.bfloat16), b, true_id=true_id)
    logits_bf16 = jax.block_until_ready(out_bf16["logits"])
    assert logits_bf16.shape == (B, 1)
    assert jnp.allclose(logits_bf16, ref, atol=5e-2, rtol=5e-2), "bf16 mismatch"

    print("KERNEL_OK")
</pallas_src>

<mosaic_0001>
module attributes {stable_mosaic.version = 11 : i64} {
  func.func @_zero_shot_kernel(%arg0: i32, %arg1: memref<8x32xf32, #tpu.memory_space<vmem>>, %arg2: memref<32x1xf32, #tpu.memory_space<vmem>>, %arg3: memref<1x1xf32, #tpu.memory_space<vmem>>, %arg4: memref<8x1xf32, #tpu.memory_space<vmem>>) attributes {dimension_semantics = [#tpu.dimension_semantics<parallel>], iteration_bounds = array<i64: 1>, scalar_prefetch = 0 : i64, scratch_operands = 0 : i64, tpu.core_type = #tpu.core_type<tc>, window_params = [{transform_indices = @transform_0, window_bounds = array<i64: 8, 32>}, {pipeline_mode = #tpu.pipeline_mode<synchronous>, transform_indices = @transform_1, window_bounds = array<i64: 32, 1>}, {pipeline_mode = #tpu.pipeline_mode<synchronous>, transform_indices = @transform_2, window_bounds = array<i64: 1, 1>}, {transform_indices = @transform_3, window_bounds = array<i64: 8, 1>}]} {
    %c0 = arith.constant 0 : index
    %c0_0 = arith.constant 0 : index
    %0 = vector.load %arg1[%c0, %c0_0] : memref<8x32xf32, #tpu.memory_space<vmem>>, vector<8x32xf32>
    %c0_1 = arith.constant 0 : index
    %c0_2 = arith.constant 0 : index
    %1 = vector.load %arg2[%c0_1, %c0_2] : memref<32x1xf32, #tpu.memory_space<vmem>>, vector<32x1xf32>
    %cst = arith.constant dense<0.000000e+00> : vector<8x1xf32>
    %2 = tpu.matmul %0, %1, %cst {dimension_numbers = #tpu.dot_dimension_numbers<[1], [0], [0], [1], [0, 0, 1, 1], [], []>} : vector<8x32xf32>, vector<32x1xf32>, vector<8x1xf32> -> vector<8x1xf32>
    %c0_3 = arith.constant 0 : index
    %c0_4 = arith.constant 0 : index
    %3 = vector.load %arg3[%c0_3, %c0_4] : memref<1x1xf32, #tpu.memory_space<vmem>>, vector<1x1xf32>
    %4 = vector.broadcast %3 : vector<1x1xf32> to vector<8x1xf32>
    %5 = arith.addf %2, %4 : vector<8x1xf32>
    %c0_5 = arith.constant 0 : index
    %c0_6 = arith.constant 0 : index
    %6 = vector.load %arg4[%c0_5, %c0_6] : memref<8x1xf32, #tpu.memory_space<vmem>>, vector<8x1xf32>
    tpu.vector_store %arg4[%c0_5, %c0_6], %5 {strides = array<i32>} : memref<8x1xf32, #tpu.memory_space<vmem>>, vector<8x1xf32>,
    return
  }
  func.func @transform_0(%arg0: i32) -> (i32, i32) {
    %c0_i32 = arith.constant 0 : i32
    %c0_i32_0 = arith.constant 0 : i32
    return %arg0, %c0_i32 : i32, i32
  }
  func.func @transform_1(%arg0: i32) -> (i32, i32) {
    %c0_i32 = arith.constant 0 : i32
    %c0_i32_0 = arith.constant 0 : i32
    %c0_i32_1 = arith.constant 0 : i32
    return %c0_i32, %c0_i32_0 : i32, i32
  }
  func.func @transform_2(%arg0: i32) -> (i32, i32) {
    %c0_i32 = arith.constant 0 : i32
    %c0_i32_0 = arith.constant 0 : i32
    %c0_i32_1 = arith.constant 0 : i32
    return %c0_i32, %c0_i32_0 : i32, i32
  }
  func.func @transform_3(%arg0: i32) -> (i32, i32) {
    %c0_i32 = arith.constant 0 : i32
    %c0_i32_0 = arith.constant 0 : i32
    return %arg0, %c0_i32 : i32, i32
  }
}

</mosaic_0001>

<llo_original>
// kernel: tpu_custom_call.1
$region0: #{tpu_custom_call.1}
  #allocation0 [shape = 'u32[]', space=smem, size = 0x4, offset = 0x4, fixed_abs, tag = 'smem constant byte address 0x4 - core index']
  #allocation1 [shape = 'u32[144,128]{1,0:T(1,128)}', space=vmem, size = 0x12000, scoped, tag = 'internal scratch']
  #allocation2 [shape = 'f32[1,1]{1,0:T(1,128)S(1)}', space=vmem, size = 0x200, scoped, tag = 'scoped memory for tpu_custom_call.1']
  %s0 = inlined_call_operand.vmem [shape: f32[8,32], index: 0, kind: input, shape index: {}]
  %s1 = inlined_call_operand.vmem [shape: f32[32,1], index: 1, kind: input, shape index: {}]
  %s2 = inlined_call_operand.<no memory space> [shape: f32[1,1], index: 2, kind: input, shape index: {}]
  %s3 = inlined_call_operand.vmem [shape: f32[8,1], index: 3, kind: output, shape index: {}]
  %s4 = sld [smem:[#allocation0]]
  $region22: #{tpu_custom_call.1} parent=0
    _
  %s6 = ssub.s32 1, %s4
  %s7 = scalar_select 0, %s6, %s4
  %v8 = vstv %s2
  %9 = vst [vmem:[#allocation2] sm:$0x1] %v8
  // Predicated region
  $region2: #{tpu_custom_call.1} parent=0 // pred_check
    _
  $region3: #{tpu_custom_call.1} parent=0 // pred_check_branch
    %11 = sbr.rel (0) target = $region5
  $region4: #{tpu_custom_call.1} parent=0 // pred_region
    _
  $region5: #{tpu_custom_call.1} parent=0 // pred_fallthru
    _
  // Predicated region
  $region6: #{tpu_custom_call.1} parent=0 // pred_check
    _
  $region7: #{tpu_custom_call.1} parent=0 // pred_check_branch
    %13 = sbr.rel (0) target = $region9
  $region8: #{tpu_custom_call.1} parent=0 // pred_region
    _
  $region9: #{tpu_custom_call.1} parent=0 // pred_fallthru
    _
  // Predicated region
  $region10: #{tpu_custom_call.1} parent=0 // pred_check
    _
  $region11: #{tpu_custom_call.1} parent=0 // pred_check_branch
    %15 = sbr.rel (0) target = $region13
  $region12: #{tpu_custom_call.1} parent=0 // pred_region
    _
  $region13: #{tpu_custom_call.1} parent=0 // pred_fallthru
    _
  %v16 = vld [vmem:[%s0] sm:$0xff]
  %v17 = vld [vmem:[%s1] sm:$0xff]
  %v18 = vld [vmem:[%s1 + $0x8] sm:$0xff]
  %v19 = vld [vmem:[%s1 + $0x10] sm:$0xff]
  %v20 = vld [vmem:[%s1 + $0x18] sm:$0xff]
  %v21 = vld [vmem:[#allocation2] sm:$0x1]
  %v23 = vlaneseq
  %v24 = vshrl.u32 %v23, 7
  %v25 = vsub.s32 0, %v24
  %v26 = vrot.slane %v21, %v25
  %vm28 = vcmask 261120
  %v30 = vsel %vm28, %v16, 0
  %32 = vmatprep.subr.mxu0 0.0
  %33 = vmatpush1.msra.mxu0 0.0
  %34 = vmatprep.subr.mxu0 0.0
  %35 = vmatpush1.msra.mxu0 0.0
  %36 = vmatprep.subr.mxu0 0.0
  %37 = vmatpush1.msra.mxu0 0.0
  %38 = vmatprep.subr.mxu0 0.0
  %39 = vmatpush1.msra.mxu0 0.0
  %40 = vmatprep.subr.mxu0 0.0
  %41 = vmatpush1.msra.mxu0 0.0
  %42 = vmatprep.subr.mxu0 0.0
  %43 = vmatpush1.msra.mxu0 0.0
  %44 = vmatprep.subr.mxu0 0.0
  %45 = vmatpush1.msra.mxu0 0.0
  %46 = vmatprep.subr.mxu0 0.0
  %47 = vmatpush1.msra.mxu0 0.0
  %48 = vmatprep.subr.mxu0 0.0
  %49 = vmatpush1.msra.mxu0 0.0
  %50 = vmatprep.subr.mxu0 0.0
  %51 = vmatpush1.msra.mxu0 0.0
  %52 = vmatprep.subr.mxu0 0.0
  %53 = vmatpush1.msra.mxu0 0.0
  %54 = vmatprep.subr.mxu0 0.0
  %55 = vmatpush1.msra.mxu0 0.0
  %56 = vmatprep.subr.mxu0 0.0
  %57 = vmatpush1.msra.mxu0 %v20
  %58 = vmatprep.subr.mxu0 0.0
  %59 = vmatpush1.msra.mxu0 %v19
  %60 = vmatprep.subr.mxu0 0.0
  %61 = vmatpush1.msra.mxu0 %v18
  %62 = vmatprep.subr.mxu0 0.0
  %63 = vmatpush1.msra.mxu0 %v17
  %64 = vmatprep.subr.mxu0 0.0
  %65 = vmatpush2.msra.mxu0 0.0
  %66 = vmatprep.subr.mxu0 0.0
  %67 = vmatpush2.msra.mxu0 0.0
  %68 = vmatprep.subr.mxu0 0.0
  %69 = vmatpush2.msra.mxu0 0.0
  %70 = vmatprep.subr.mxu0 0.0
  %71 = vmatpush2.msra.mxu0 0.0
  %72 = vmatprep.subr.mxu0 0.0
  %73 = vmatpush2.msra.mxu0 0.0
  %74 = vmatprep.subr.mxu0 0.0
  %75 = vmatpush2.msra.mxu0 0.0
  %76 = vmatprep.subr.mxu0 0.0
  %77 = vmatpush2.msra.mxu0 0.0
  %78 = vmatprep.subr.mxu0 0.0
  %79 = vmatpush2.msra.mxu0 0.0
  %80 = vmatprep.subr.mxu0 0.0
  %81 = vmatpush2.msra.mxu0 0.0
  %82 = vmatprep.subr.mxu0 0.0
  %83 = vmatpush2.msra.mxu0 0.0
  %84 = vmatprep.subr.mxu0 0.0
  %85 = vmatpush2.msra.mxu0 0.0
  %86 = vmatprep.subr.mxu0 0.0
  %87 = vmatpush2.msra.mxu0 0.0
  %88 = vmatprep.subr.mxu0 0.0
  %89 = vmatpush2.msra.mxu0 0.0
  %90 = vmatprep.subr.mxu0 0.0
  %91 = vmatpush2.msra.mxu0 0.0
  %92 = vmatprep.subr.mxu0 0.0
  %93 = vmatpush2.msra.mxu0 0.0
  %94 = vmatprep.subr.mxu0 0.0
  %95 = vmatpush2.msra.mxu0 0.0
  %96 = vmatprep.mubr.f32.mxu0 0.0
  %97 = vmatmul.mubr.f32.gmra.mxu0 %v30
  %v98 = vpop.f32.mrf.mxu0
  %v99 = vadd.f32 %v26, %v98
  %v100 = vpop.f32.mrf.mxu0
  %101 = vdwg.mxu0
  %vm102 = vcmask 7168
  %103 = vst.msk [vmem:[%s3] sm:$0xff] %vm102, %v99
  // Predicated region
  $region14: #{tpu_custom_call.1} parent=0 // pred_check
    _
  $region15: #{tpu_custom_call.1} parent=0 // pred_check_branch
    %105 = sbr.rel (0) target = $region17
  $region16: #{tpu_custom_call.1} parent=0 // pred_region
    _
  $region17: #{tpu_custom_call.1} parent=0 // pred_fallthru
    _
  // Predicated region
  $region18: #{tpu_custom_call.1} parent=0 // pred_check
    _
  $region19: #{tpu_custom_call.1} parent=0 // pred_check_branch
    %107 = sbr.rel (0) target = $region21
  $region20: #{tpu_custom_call.1} parent=0 // pred_region
    _
  $region21: #{tpu_custom_call.1} parent=0 // pred_fallthru
    _

</llo_original>
